<compile_context>
chip_gen: v6e
topology: v6e:2x2x1
jax: 0.10.0
libtpu: 0.0.40
codegen_flags: <defaults>
</compile_context>

<pallas_src>
import functools

import jax
import jax.numpy as jnp
from jax.experimental import pallas as pl
from jax.experimental.pallas import tpu as pltpu

_TARGET_BLOCK_BYTES = 4 * 1024 * 1024    # ~4 MiB input blocks
_VMEM_LIMIT_BYTES = 48 * 1024 * 1024     # 2x in + 2x out double-buffers + temps stay well under this


def _scharr_kernel(x_ref, o_ref, *, W):
    # x_ref block: (CB, H*W) -- one (n, c) plane per sublane row, pixels on lanes.
    x = x_ref[...]
    L = x.shape[-1]

    # Boundary masks built once at (1, L); jnp.where broadcasts them across the
    # CB sublane rows.  No integer divide: top/bottom rows are range checks.
    p = jax.lax.broadcasted_iota(jnp.int32, (1, L), 1)
    col = p % W
    left = col == 0
    right = col == (W - 1)
    top = p < W
    bot = p >= (L - W)

    def nbr(v, k, edge_mask):
        # Value of the neighbour pixel at flat position p + k, zeroed where that
        # neighbour falls outside the plane (reproduces Conv2d zero padding).
        # Wrap-around lanes from the rotate always land on masked positions.
        shift = (-k) % L
        if L % 128 == 0:
            r = pltpu.roll(v, shift, 1)       # single XLU lane rotate
        else:
            r = jnp.roll(v, shift, axis=1)    # odd lane widths: let Mosaic choose
        return jnp.where(edge_mask, 0.0, r)

    # Shared vertical pass: [3, 10, 3] smooth and central difference.
    xu = nbr(x, -W, top)                      # row above (zero at r == 0)
    xd = nbr(x, +W, bot)                      # row below (zero at r == H-1)
    vsm = 10.0 * x + 3.0 * (xu + xd)
    vdf = xd - xu

    # Scharr-x: horizontal central difference of the vertically smoothed plane.
    gx = nbr(vsm, 1, right) - nbr(vsm, -1, left)
    o_ref[...] = gx * gx                      # stash; gx-pipeline temporaries die here

    # Scharr-y: horizontal [3, 10, 3] smooth of the vertical central difference.
    gy = 10.0 * vdf + 3.0 * (nbr(vdf, 1, right) + nbr(vdf, -1, left))
    o_ref[...] = jnp.sqrt(o_ref[...] + gy * gy + 1e-6)


def scharr_edge(x, *, target_block_bytes=_TARGET_BLOCK_BYTES):
    """x: (N, C, H, W) float32 -> (N, C, H, W) float32 edge magnitude."""
    N, C, H, W = x.shape
    G = N * C
    L = H * W
    xf = x.reshape(G, L)  # free reshape: planes on sublanes, flattened pixels on lanes

    # Pad the plane axis to a multiple of 8 sublanes so every block tiles cleanly
    # (keeps the grid pipelined instead of collapsing to a single (G, L) block).
    Gp = ((G + 7) // 8) * 8
    if Gp != G:
        xf = jnp.pad(xf, ((0, Gp - G), (0, 0)))

    # Planes-per-block: a multiple of 8 dividing Gp, sized to ~target_block_bytes,
    # capped so the grid has >= 2 steps whenever possible (megacore sharding on
    # v7x + input/output double buffering on all generations).
    plane_bytes = L * x.dtype.itemsize
    max_rows = max(8, target_block_bytes // max(1, plane_bytes))
    if Gp > 8:
        max_rows = min(max_rows, Gp // 2)
    cb = 8
    for cand in range(8, Gp + 1, 8):
        if Gp % cand == 0 and cand <= max_rows:
            cb = cand
    grid = (Gp // cb,)
    # TODO(synk): for very large planes (8 * H * W * 4 bytes beyond the VMEM budget) add a
    # second grid axis tiling H into row strips with a one-row halo instead of whole-plane blocks.

    kernel = functools.partial(_scharr_kernel, W=W)
    out_flat = pl.pallas_call(
        kernel,
        out_shape=jax.ShapeDtypeStruct((Gp, L), x.dtype),
        grid_spec=pltpu.PrefetchScalarGridSpec(
            num_scalar_prefetch=0,
            grid=grid,
            in_specs=[pl.BlockSpec((cb, L), lambda i: (i, 0))],
            out_specs=pl.BlockSpec((cb, L), lambda i: (i, 0)),
        ),
        compiler_params=pltpu.CompilerParams(
            dimension_semantics=("parallel",),
            vmem_limit_bytes=_VMEM_LIMIT_BYTES,
        ),
        cost_estimate=pl.CostEstimate(
            flops=20 * Gp * L,
            transcendentals=Gp * L,
            bytes_accessed=2 * Gp * L * x.dtype.itemsize,
        ),
    )(xf)
    if Gp != G:
        out_flat = out_flat[:G]
    return out_flat.reshape(N, C, H, W)


def _scharr_edge_ref(x):
    # Pure-JAX reference (depthwise conv via lax.conv_general_dilated).
    N, C, H, W = x.shape
    sx = jnp.array([[-3.0, 0.0, 3.0], [-10.0, 0.0, 10.0], [-3.0, 0.0, 3.0]], jnp.float32)
    sy = jnp.array([[-3.0, -10.0, -3.0], [0.0, 0.0, 0.0], [3.0, 10.0, 3.0]], jnp.float32)
    wx = jnp.tile(sx[None, None], (C, 1, 1, 1))  # (C, 1, 3, 3) depthwise
    wy = jnp.tile(sy[None, None], (C, 1, 1, 1))
    dn = jax.lax.conv_dimension_numbers(x.shape, wx.shape, ("NCHW", "OIHW", "NCHW"))
    gx = jax.lax.conv_general_dilated(x, wx, (1, 1), ((1, 1), (1, 1)),
                                      dimension_numbers=dn, feature_group_count=C,
                                      precision=jax.lax.Precision.HIGHEST)
    gy = jax.lax.conv_general_dilated(x, wy, (1, 1), ((1, 1), (1, 1)),
                                      dimension_numbers=dn, feature_group_count=C,
                                      precision=jax.lax.Precision.HIGHEST)
    return jnp.sqrt(gx ** 2 + gy ** 2 + 1e-6)


if __name__ == "__main__":
    key = jax.random.PRNGKey(0)
    x = jax.random.normal(key, (2, 4, 16, 16), dtype=jnp.float32)

    out = scharr_edge(x)
    out = jax.block_until_ready(out)

    ref = _scharr_edge_ref(x)
    assert out.shape == (2, 4, 16, 16)
    assert jnp.allclose(out, ref, atol=1e-3, rtol=1e-3)

    print("KERNEL_OK")
</pallas_src>

<mosaic_0001>
module attributes {stable_mosaic.version = 11 : i64} {
  func.func @_scharr_kernel(%arg0: i32, %arg1: memref<8x256xf32, #tpu.memory_space<vmem>>, %arg2: memref<8x256xf32, #tpu.memory_space<vmem>>) attributes {dimension_semantics = [#tpu.dimension_semantics<parallel>], iteration_bounds = array<i64: 1>, scalar_prefetch = 0 : i64, scratch_operands = 0 : i64, tpu.core_type = #tpu.core_type<tc>, window_params = [{transform_indices = @transform_0, window_bounds = array<i64: 8, 256>}, {transform_indices = @transform_1, window_bounds = array<i64: 8, 256>}]} {
    %c0 = arith.constant 0 : index
    %c0_0 = arith.constant 0 : index
    %0 = vector.load %arg1[%c0, %c0_0] : memref<8x256xf32, #tpu.memory_space<vmem>>, vector<8x256xf32>
    %1 = tpu.iota {dimensions = array<i32: 1>} : vector<1x256xi32>
    %c16_i32 = arith.constant 16 : i32
    %c0_i32 = arith.constant 0 : i32
    %2 = arith.cmpi eq, %c16_i32, %c0_i32 : i32
    %c1_i32 = arith.constant 1 : i32
    %3 = arith.select %2, %c1_i32, %c16_i32 : i32
    %4 = vector.broadcast %3 : i32 to vector<1x256xi32>
    %5 = arith.remsi %1, %4 : vector<1x256xi32>
    %c0_i32_1 = arith.constant 0 : i32
    %6 = vector.broadcast %c0_i32_1 : i32 to vector<1x256xi32>
    %7 = arith.cmpi ne, %5, %6 : vector<1x256xi32>
    %c0_i32_2 = arith.constant 0 : i32
    %8 = vector.broadcast %c0_i32_2 : i32 to vector<1x256xi32>
    %9 = arith.cmpi slt, %5, %8 : vector<1x256xi32>
    %c0_i32_3 = arith.constant 0 : i32
    %10 = arith.cmpi slt, %3, %c0_i32_3 : i32
    %11 = vector.broadcast %10 : i1 to vector<1x256xi1>
    %12 = vector.broadcast %11 : vector<1x256xi1> to vector<1x256xi1>
    %13 = arith.xori %9, %12 : vector<1x256xi1>
    %14 = arith.andi %13, %7 : vector<1x256xi1>
    %15 = vector.broadcast %3 : i32 to vector<1x256xi32>
    %16 = arith.addi %5, %15 : vector<1x256xi32>
    %17 = arith.select %14, %16, %5 : vector<1x256xi1>, vector<1x256xi32>
    %c0_i32_4 = arith.constant 0 : i32
    %18 = vector.broadcast %c0_i32_4 : i32 to vector<1x256xi32>
    %19 = arith.cmpi eq, %17, %18 : vector<1x256xi32>
    %c15_i32 = arith.constant 15 : i32
    %20 = vector.broadcast %c15_i32 : i32 to vector<1x256xi32>
    %21 = arith.cmpi eq, %17, %20 : vector<1x256xi32>
    %c16_i32_5 = arith.constant 16 : i32
    %22 = vector.broadcast %c16_i32_5 : i32 to vector<1x256xi32>
    %23 = arith.cmpi slt, %1, %22 : vector<1x256xi32>
    %c240_i32 = arith.constant 240 : i32
    %24 = vector.broadcast %c240_i32 : i32 to vector<1x256xi32>
    %25 = arith.cmpi sge, %1, %24 : vector<1x256xi32>
    %c16_i32_6 = arith.constant 16 : i32
    %26 = tpu.dynamic_rotate %0 by %c16_i32_6 dim 1 : vector<8x256xf32>, i32 -> vector<8x256xf32>
    %cst = arith.constant 0.000000e+00 : f32
    %27 = vector.shape_cast %23 : vector<1x256xi1> to vector<1x256xi1>
    %28 = vector.broadcast %27 : vector<1x256xi1> to vector<8x256xi1>
    %29 = vector.broadcast %cst : f32 to vector<8x256xf32>
    %30 = arith.select %28, %29, %26 : vector<8x256xi1>, vector<8x256xf32>
    %c240_i32_7 = arith.constant 240 : i32
    %31 = tpu.dynamic_rotate %0 by %c240_i32_7 dim 1 : vector<8x256xf32>, i32 -> vector<8x256xf32>
    %cst_8 = arith.constant 0.000000e+00 : f32
    %32 = vector.shape_cast %25 : vector<1x256xi1> to vector<1x256xi1>
    %33 = vector.broadcast %32 : vector<1x256xi1> to vector<8x256xi1>
    %34 = vector.broadcast %cst_8 : f32 to vector<8x256xf32>
    %35 = arith.select %33, %34, %31 : vector<8x256xi1>, vector<8x256xf32>
    %cst_9 = arith.constant 1.000000e+01 : f32
    %36 = vector.broadcast %cst_9 : f32 to vector<8x256xf32>
    %37 = arith.mulf %36, %0 : vector<8x256xf32>
    %38 = arith.addf %30, %35 : vector<8x256xf32>
    %cst_10 = arith.constant 3.000000e+00 : f32
    %39 = vector.broadcast %cst_10 : f32 to vector<8x256xf32>
    %40 = arith.mulf %39, %38 : vector<8x256xf32>
    %41 = arith.addf %37, %40 : vector<8x256xf32>
    %42 = arith.subf %35, %30 : vector<8x256xf32>
    %c255_i32 = arith.constant 255 : i32
    %43 = tpu.dynamic_rotate %41 by %c255_i32 dim 1 : vector<8x256xf32>, i32 -> vector<8x256xf32>
    %cst_11 = arith.constant 0.000000e+00 : f32
    %44 = vector.shape_cast %21 : vector<1x256xi1> to vector<1x256xi1>
    %45 = vector.broadcast %44 : vector<1x256xi1> to vector<8x256xi1>
    %46 = vector.broadcast %cst_11 : f32 to vector<8x256xf32>
    %47 = arith.select %45, %46, %43 : vector<8x256xi1>, vector<8x256xf32>
    %c1_i32_12 = arith.constant 1 : i32
    %48 = tpu.dynamic_rotate %41 by %c1_i32_12 dim 1 : vector<8x256xf32>, i32 -> vector<8x256xf32>
    %cst_13 = arith.constant 0.000000e+00 : f32
    %49 = vector.shape_cast %19 : vector<1x256xi1> to vector<1x256xi1>
    %50 = vector.broadcast %49 : vector<1x256xi1> to vector<8x256xi1>
    %51 = vector.broadcast %cst_13 : f32 to vector<8x256xf32>
    %52 = arith.select %50, %51, %48 : vector<8x256xi1>, vector<8x256xf32>
    %53 = arith.subf %47, %52 : vector<8x256xf32>
    %54 = arith.mulf %53, %53 : vector<8x256xf32>
    %c0_14 = arith.constant 0 : index
    %c0_15 = arith.constant 0 : index
    %55 = vector.load %arg2[%c0_14, %c0_15] : memref<8x256xf32, #tpu.memory_space<vmem>>, vector<8x256xf32>
    tpu.vector_store %arg2[%c0_14, %c0_15], %54 {strides = array<i32>} : memref<8x256xf32, #tpu.memory_space<vmem>>, vector<8x256xf32>,
    %cst_16 = arith.constant 1.000000e+01 : f32
    %56 = vector.broadcast %cst_16 : f32 to vector<8x256xf32>
    %57 = arith.mulf %56, %42 : vector<8x256xf32>
    %c255_i32_17 = arith.constant 255 : i32
    %58 = tpu.dynamic_rotate %42 by %c255_i32_17 dim 1 : vector<8x256xf32>, i32 -> vector<8x256xf32>
    %cst_18 = arith.constant 0.000000e+00 : f32
    %59 = vector.shape_cast %21 : vector<1x256xi1> to vector<1x256xi1>
    %60 = vector.broadcast %59 : vector<1x256xi1> to vector<8x256xi1>
    %61 = vector.broadcast %cst_18 : f32 to vector<8x256xf32>
    %62 = arith.select %60, %61, %58 : vector<8x256xi1>, vector<8x256xf32>
    %c1_i32_19 = arith.constant 1 : i32
    %63 = tpu.dynamic_rotate %42 by %c1_i32_19 dim 1 : vector<8x256xf32>, i32 -> vector<8x256xf32>
    %cst_20 = arith.constant 0.000000e+00 : f32
    %64 = vector.shape_cast %19 : vector<1x256xi1> to vector<1x256xi1>
    %65 = vector.broadcast %64 : vector<1x256xi1> to vector<8x256xi1>
    %66 = vector.broadcast %cst_20 : f32 to vector<8x256xf32>
    %67 = arith.select %65, %66, %63 : vector<8x256xi1>, vector<8x256xf32>
    %68 = arith.addf %62, %67 : vector<8x256xf32>
    %cst_21 = arith.constant 3.000000e+00 : f32
    %69 = vector.broadcast %cst_21 : f32 to vector<8x256xf32>
    %70 = arith.mulf %69, %68 : vector<8x256xf32>
    %71 = arith.addf %57, %70 : vector<8x256xf32>
    %c0_22 = arith.constant 0 : index
    %c0_23 = arith.constant 0 : index
    %72 = vector.load %arg2[%c0_22, %c0_23] : memref<8x256xf32, #tpu.memory_space<vmem>>, vector<8x256xf32>
    %73 = arith.mulf %71, %71 : vector<8x256xf32>
    %74 = arith.addf %72, %73 : vector<8x256xf32>
    %cst_24 = arith.constant 9.99999997E-7 : f32
    %75 = vector.broadcast %cst_24 : f32 to vector<8x256xf32>
    %76 = arith.addf %74, %75 : vector<8x256xf32>
    %77 = math.sqrt %76 : vector<8x256xf32>
    %c0_25 = arith.constant 0 : index
    %c0_26 = arith.constant 0 : index
    %78 = vector.load %arg2[%c0_25, %c0_26] : memref<8x256xf32, #tpu.memory_space<vmem>>, vector<8x256xf32>
    tpu.vector_store %arg2[%c0_25, %c0_26], %77 {strides = array<i32>} : memref<8x256xf32, #tpu.memory_space<vmem>>, vector<8x256xf32>,
    return
  }
  func.func @transform_0(%arg0: i32) -> (i32, i32) {
    %c0_i32 = arith.constant 0 : i32
    %c0_i32_0 = arith.constant 0 : i32
    return %arg0, %c0_i32 : i32, i32
  }
  func.func @transform_1(%arg0: i32) -> (i32, i32) {
    %c0_i32 = arith.constant 0 : i32
    %c0_i32_0 = arith.constant 0 : i32
    return %arg0, %c0_i32 : i32, i32
  }
}

</mosaic_0001>

<llo_original>
// kernel: tpu_custom_call.1
$region0: #{tpu_custom_call.1}
  #allocation0 [shape = 'u32[]', space=smem, size = 0x4, offset = 0x4, fixed_abs, tag = 'smem constant byte address 0x4 - core index']
  #allocation1 [shape = 'u32[144,128]{1,0:T(1,128)}', space=vmem, size = 0x12000, scoped, tag = 'internal scratch']
  %s0 = inlined_call_operand.hbm [shape: f32[8,256], index: 0, kind: input, shape index: {}]
  %s1 = inlined_call_operand.hbm [shape: f32[8,256], index: 1, kind: output, shape index: {}]
  %s2 = sld [smem:[#allocation0]]
  $region18: #{tpu_custom_call.1} parent=0
    _
  %s4 = ssub.s32 1, %s2
  %s5 = scalar_select 0, %s4, %s2
  $region1: #{tpu_custom_call.1} parent=0
    #allocation2 [shape = 'u8[8192]{0}', space=vmem, size = 0x2000, scoped, tag = 'input window, operand 0, single buffered']
    #allocation3 [shape = 's32[1]{0}', space=sflag, size = 0x4, scoped, tag = 'scoped memory for tpu_custom_call.1']
    #allocation4 [shape = 's32[1]{0}', space=sflag, size = 0x4, scoped, tag = 'scoped memory for tpu_custom_call.1']
    #allocation5 [shape = 'u8[8192]{0}', space=vmem, size = 0x2000, scoped, tag = 'output window, operand 0, single buffered']
    %6 = vsyncpa [#allocation3], 0
    %7 = vsyncpa [#allocation4], 0
    // Predicated region
    $region2: #{tpu_custom_call.1} parent=1 // pred_check
      _
    $region3: #{tpu_custom_call.1} parent=1 // pred_check_branch
      %9 = sbr.rel (0) target = $region5
    $region4: #{tpu_custom_call.1} parent=1 // pred_region
      %s11 = ssub.s32 256, 256
      %12 = vsyncadd [#allocation3], %s11
      %s14 = sshll.u32 [#allocation2], 4
      %s15 = int_to_ptr.vmem [resolvable:$true] %s14
      %17 = dma.hbm_to_vmem [thread:$0]  %s0, 256, %s15, [#allocation3]
    $region5: #{tpu_custom_call.1} parent=1 // pred_fallthru
      _
    // Predicated region
    $region6: #{tpu_custom_call.1} parent=1 // pred_check
      _
    $region7: #{tpu_custom_call.1} parent=1 // pred_check_branch
      %19 = sbr.rel (0) target = $region9
    $region8: #{tpu_custom_call.1} parent=1 // pred_region
      %20 = dma.done [#allocation3], 256
    $region9: #{tpu_custom_call.1} parent=1 // pred_fallthru
      _
    %v21 = vld [vmem:[#allocation2] sm:$0xff]
    %v22 = vld [vmem:[#allocation2 + $0x8] sm:$0xff]
    %v23 = vlaneseq
    %v24 = vand.u32 %v23, 127
    %v25 = vadd.s32 %v24, 128
    %vm26 = vcmp.lt.s32.totalorder %v24, 0
    %v27 = vsub.s32 0, %v24
    %v28 = vsel %vm26, %v27, %v24
    %v29 = vshrl.u32 %v28, 4
    %v30 = vand.u32 %v28, 15
    %v31 = vsub.s32 0, %v30
    %v32 = vsel %vm26, %v31, %v30
    %vm33 = vcmp.lt.s32.totalorder %v25, 0
    %v34 = vsub.s32 0, %v25
    %v35 = vsel %vm33, %v34, %v25
    %v36 = vshrl.u32 %v35, 4
    %v37 = vand.u32 %v35, 15
    %v38 = vsub.s32 0, %v37
    %v39 = vsel %vm33, %v38, %v37
    %vm40 = vcmp.ne.s32.totalorder %v32, 0
    %vm41 = vcmp.ne.s32.totalorder %v39, 0
    %vm42 = vcmp.lt.s32.totalorder %v32, 0
    %vm43 = vcmp.lt.s32.totalorder %v39, 0
    %vm44 = vmand %vm42, %vm40
    %vm45 = vmand %vm43, %vm41
    %v46 = vadd.s32 %v32, 16
    %v47 = vadd.s32 %v39, 16
    %v48 = vsel %vm44, %v46, %v32
    %v49 = vsel %vm45, %v47, %v39
    %vm50 = vcmp.eq.s32.totalorder %v48, 0
    %vm51 = vcmp.eq.s32.totalorder %v49, 0
    %vm52 = vcmp.eq.s32.totalorder %v48, 15
    %vm53 = vcmp.eq.s32.totalorder %v49, 15
    %vm54 = vcmp.lt.s32.totalorder %v24, 16
    %vm55 = vcmp.lt.s32.totalorder %v25, 16
    %vm56 = vcmp.ge.s32.totalorder %v24, 240
    %vm57 = vcmp.ge.s32.totalorder %v25, 240
    %58 = vrot.lane.b32.xlu0 %v21, 16
    %v59 = vpop.permute.xlu0 %58
    %60 = vrot.lane.b32.xlu0 %v22, 16
    %v61 = vpop.permute.xlu0 %60
    %v62 = vsel %vm54, %v59, %v61
    %v63 = vsel %vm54, %v61, %v59
    %v64 = vsel %vm54, 1, 0
    %v65 = vsel %vm55, 1, 0
    %vm66 = vcmp.eq.s32.totalorder %v64, 1
    %vm67 = vcmp.eq.s32.totalorder %v65, 1
    %v68 = vsel %vm66, 0.0, %v63
    %v69 = vsel %vm67, 0.0, %v62
    %70 = vrot.lane.b32.xlu0 %v21, 112
    %v71 = vpop.permute.xlu0 %70
    %72 = vrot.lane.b32.xlu0 %v22, 112
    %v73 = vpop.permute.xlu0 %72
    %vm74 = vcmp.lt.s32.totalorder %v24, 112
    %v75 = vsel %vm74, %v71, %v73
    %v76 = vsel %vm74, %v73, %v71
    %v77 = vsel %vm56, 1, 0
    %v78 = vsel %vm57, 1, 0
    %vm79 = vcmp.eq.s32.totalorder %v77, 1
    %vm80 = vcmp.eq.s32.totalorder %v78, 1
    %v81 = vsel %vm79, 0.0, %v75
    %v82 = vsel %vm80, 0.0, %v76
    %v83 = vmul.f32 %v21, 10.0
    %v84 = vmul.f32 %v22, 10.0
    %v85 = vadd.f32 %v68, %v81
    %v86 = vadd.f32 %v69, %v82
    %v87 = vmul.f32 %v85, 3.0
    %v88 = vmul.f32 %v86, 3.0
    %v89 = vadd.f32 %v83, %v87
    %v90 = vadd.f32 %v84, %v88
    %v91 = vsub.f32 %v81, %v68
    %v92 = vsub.f32 %v82, %v69
    %93 = vrot.lane.b32.xlu0 %v89, 127
    %v94 = vpop.permute.xlu0 %93
    %95 = vrot.lane.b32.xlu0 %v90, 127
    %v96 = vpop.permute.xlu0 %95
    %vm97 = vcmp.lt.s32.totalorder %v24, 127
    %v98 = vsel %vm97, %v94, %v96
    %v99 = vsel %vm97, %v96, %v94
    %v100 = vsel %vm52, 1, 0
    %v101 = vsel %vm53, 1, 0
    %vm102 = vcmp.eq.s32.totalorder %v100, 1
    %vm103 = vcmp.eq.s32.totalorder %v101, 1
    %v104 = vsel %vm102, 0.0, %v98
    %v105 = vsel %vm103, 0.0, %v99
    %106 = vrot.lane.b32.xlu0 %v89, 1
    %v107 = vpop.permute.xlu0 %106
    %108 = vrot.lane.b32.xlu0 %v90, 1
    %v109 = vpop.permute.xlu0 %108
    %vm110 = vcmp.lt.s32.totalorder %v24, 1
    %v111 = vsel %vm110, %v107, %v109
    %v112 = vsel %vm110, %v109, %v107
    %v113 = vsel %vm50, 1, 0
    %v114 = vsel %vm51, 1, 0
    %vm115 = vcmp.eq.s32.totalorder %v113, 1
    %vm116 = vcmp.eq.s32.totalorder %v114, 1
    %v117 = vsel %vm115, 0.0, %v112
    %v118 = vsel %vm116, 0.0, %v111
    %v119 = vsub.f32 %v104, %v117
    %v120 = vsub.f32 %v105, %v118
    %v121 = vmul.f32 %v119, %v119
    %v122 = vmul.f32 %v120, %v120
    %123 = vst [vmem:[#allocation5] sm:$0xff] %v121
    %124 = vst [vmem:[#allocation5 + $0x8] sm:$0xff] %v122
    %v125 = vmul.f32 %v91, 10.0
    %v126 = vmul.f32 %v92, 10.0
    %127 = vrot.lane.b32.xlu0 %v91, 127
    %v128 = vpop.permute.xlu0 %127
    %129 = vrot.lane.b32.xlu0 %v92, 127
    %v130 = vpop.permute.xlu0 %129
    %v131 = vsel %vm97, %v128, %v130
    %v132 = vsel %vm97, %v130, %v128
    %v133 = vsel %vm102, 0.0, %v131
    %v134 = vsel %vm103, 0.0, %v132
    %135 = vrot.lane.b32.xlu0 %v91, 1
    %v136 = vpop.permute.xlu0 %135
    %137 = vrot.lane.b32.xlu0 %v92, 1
    %v138 = vpop.permute.xlu0 %137
    %v139 = vsel %vm110, %v136, %v138
    %v140 = vsel %vm110, %v138, %v136
    %v141 = vsel %vm115, 0.0, %v140
    %v142 = vsel %vm116, 0.0, %v139
    %v143 = vadd.f32 %v133, %v141
    %v144 = vadd.f32 %v134, %v142
    %v145 = vmul.f32 %v143, 3.0
    %v146 = vmul.f32 %v144, 3.0
    %v147 = vadd.f32 %v125, %v145
    %v148 = vadd.f32 %v126, %v146
    %v149 = vld [vmem:[#allocation5] sm:$0xff]
    %v150 = vld [vmem:[#allocation5 + $0x8] sm:$0xff]
    %v151 = vmul.f32 %v147, %v147
    %v152 = vmul.f32 %v148, %v148
    %v153 = vadd.f32 %v149, %v151
    %v154 = vadd.f32 %v150, %v152
    %v155 = vadd.f32 %v153, 1e-06
    %v156 = vadd.f32 %v154, 1e-06
    %v157 = vrsqrt.pop %v155
    %v158 = vmul.f32 %v155, %v157
    %vm159 = vcmp.eq.f32.partialorder %v155, inf
    %v160 = vsel %vm159, %v155, %v158
    %vm161 = vcmp.eq.f32.partialorder %v155, 0.0
    %v162 = vand.u32 %v155, 2147483648
    %v163 = vsel %vm161, %v162, %v160
    %v164 = vrsqrt.pop %v156
    %v165 = vmul.f32 %v156, %v164
    %vm166 = vcmp.eq.f32.partialorder %v156, inf
    %v167 = vsel %vm166, %v156, %v165
    %vm168 = vcmp.eq.f32.partialorder %v156, 0.0
    %v169 = vand.u32 %v156, 2147483648
    %v170 = vsel %vm168, %v169, %v167
    %171 = vst [vmem:[#allocation5] sm:$0xff] %v163
    %172 = vst [vmem:[#allocation5 + $0x8] sm:$0xff] %v170
    // Predicated region
    $region10: #{tpu_custom_call.1} parent=1 // pred_check
      _
    $region11: #{tpu_custom_call.1} parent=1 // pred_check_branch
      %174 = sbr.rel (0) target = $region13
    $region12: #{tpu_custom_call.1} parent=1 // pred_region
      %s176 = ssub.s32 256, 256
      %177 = vsyncadd [#allocation4], %s176
      %s179 = sshll.u32 [#allocation5], 4
      %s180 = int_to_ptr.vmem [resolvable:$true] %s179
      %182 = dma.vmem_to_hbm [thread:$0]  %s180, 256, %s1, [#allocation4]
    $region13: #{tpu_custom_call.1} parent=1 // pred_fallthru
      _
    // Predicated region
    $region14: #{tpu_custom_call.1} parent=1 // pred_check
      _
    $region15: #{tpu_custom_call.1} parent=1 // pred_check_branch
      %184 = sbr.rel (0) target = $region17
    $region16: #{tpu_custom_call.1} parent=1 // pred_region
      %185 = dma.done [#allocation4], 256
    $region17: #{tpu_custom_call.1} parent=1 // pred_fallthru
      _
    %186 = vsyncpa [#allocation3], 1
    %187 = vsyncpa [#allocation4], 1

</llo_original>
